<compile_context>
chip_gen: v5e
topology: v5e:2x2
jax: 0.10.0
libtpu: 0.0.40
codegen_flags: <defaults>
</compile_context>

<pallas_src>
import jax
import jax.numpy as jnp
from jax.experimental import pallas as pl
from jax.experimental.pallas import tpu as pltpu


def _round_up(n, m):
    return ((n + m - 1) // m) * m


def mlp_kernel(x_ref, w1_ref, b1_ref, w2_ref, b2_ref,
               w3_ref, b3_ref, w4_ref, b4_ref, o_ref):
    # layer 1: Linear(784->256) + ReLU.  x cast to bf16 in-kernel; f32 accumulation.
    x = x_ref[...].astype(jnp.bfloat16)
    h = jnp.dot(x, w1_ref[...], preferred_element_type=jnp.float32)
    h = jnp.maximum(h + b1_ref[...], 0.0)
    # layer 2: Linear(256->128) + ReLU
    h = jnp.dot(h.astype(jnp.bfloat16), w2_ref[...],
                preferred_element_type=jnp.float32)
    h = jnp.maximum(h + b2_ref[...], 0.0)
    # layer 3: Linear(128->128 padded; real cols 0..63) + ReLU
    #   padded cols: w3 cols zero, b3 zero -> relu(0) = 0
    h = jnp.dot(h.astype(jnp.bfloat16), w3_ref[...],
                preferred_element_type=jnp.float32)
    h = jnp.maximum(h + b3_ref[...], 0.0)
    # layer 4: Linear(128->128 padded; real cols 0..9); w4 rows 64..127 are zero
    #   so the padded h lanes contribute nothing; pad cols get bias -1e30.
    z = jnp.dot(h.astype(jnp.bfloat16), w4_ref[...],
                preferred_element_type=jnp.float32)
    z = z + b4_ref[...]
    # LogSoftmax over the 128 (lane-dense) logits in f32; padded cols: exp()->0.
    m = jnp.max(z, axis=-1, keepdims=True)
    s = z - m
    lse = jnp.log(jnp.sum(jnp.exp(s), axis=-1, keepdims=True))
    o_ref[...] = s - lse


def prepare_params(params):
    """One-time (model-load) padding + bf16 casting of the weights/biases."""
    w1 = params["w1"].astype(jnp.bfloat16)                              # (784, 256)
    w2 = params["w2"].astype(jnp.bfloat16)                              # (256, 128)
    w3 = jnp.zeros((128, 128), jnp.bfloat16).at[:, :64].set(
        params["w3"].astype(jnp.bfloat16))                              # (128, 128)
    w4 = jnp.zeros((128, 128), jnp.bfloat16).at[:64, :10].set(
        params["w4"].astype(jnp.bfloat16))                              # (128, 128)
    b1 = params["b1"]                                                   # (1, 256) f32
    b2 = params["b2"]                                                   # (1, 128) f32
    b3 = jnp.zeros((1, 128), jnp.float32).at[:, :64].set(params["b3"])  # (1, 128) f32
    b4 = jnp.full((1, 128), -1e30, jnp.float32).at[:, :10].set(
        params["b4"])                                                   # (1, 128) f32
    return {"w1": w1, "b1": b1, "w2": w2, "b2": b2,
            "w3": w3, "b3": b3, "w4": w4, "b4": b4}


def _choose_tb(B, tb_max=1024):
    """Batch tile: big (<=1024) for few grid steps, but force >=2 grid steps
    when possible so the 'parallel' batch axis can shard across v7x's 2 TCs."""
    b_min = _round_up(B, 16)
    if b_min >= 32:
        return min(tb_max, _round_up((b_min + 1) // 2, 16))
    return b_min


def network_forward(x, prepped, *, tb_max=1024):
    """x: (B, 784) float32.  prepped: output of prepare_params()."""
    B, f_in = x.shape
    assert f_in == 784

    tb = _choose_tb(B, tb_max)
    B_pad = _round_up(B, tb)

    # Only pad the batch axis if the grid needs it; x is otherwise streamed as-is.
    if B_pad != B:
        xp = jnp.zeros((B_pad, 784), x.dtype).at[:B].set(x)
    else:
        xp = x

    def rep(shape):
        # constant block index: parameter fetched once, held VMEM-resident
        return pl.BlockSpec(shape, lambda i: (0, 0))

    out = pl.pallas_call(
        mlp_kernel,
        out_shape=jax.ShapeDtypeStruct((B_pad, 128), jnp.float32),
        grid=(B_pad // tb,),
        in_specs=[
            pl.BlockSpec((tb, 784), lambda i: (i, 0)),   # x streamed over batch (f32)
            rep(prepped["w1"].shape), rep(prepped["b1"].shape),
            rep(prepped["w2"].shape), rep(prepped["b2"].shape),
            rep(prepped["w3"].shape), rep(prepped["b3"].shape),
            rep(prepped["w4"].shape), rep(prepped["b4"].shape),
        ],
        out_specs=pl.BlockSpec((tb, 128), lambda i: (i, 0)),  # lane-dense out
        compiler_params=pltpu.CompilerParams(
            dimension_semantics=("parallel",),
            vmem_limit_bytes=32 * 1024 * 1024),
    )(xp,
      prepped["w1"], prepped["b1"],
      prepped["w2"], prepped["b2"],
      prepped["w3"], prepped["b3"],
      prepped["w4"], prepped["b4"])

    return out[:B, :10]


def init_params(key):
    """Deterministic init matching nn.Linear's default uniform(-1/sqrt(fan_in), ...)."""
    dims = [784, 256, 128, 64, 10]
    params = {}
    for idx, (fan_in, fan_out) in enumerate(zip(dims[:-1], dims[1:]), start=1):
        key, kw, kb = jax.random.split(key, 3)
        bound = 1.0 / jnp.sqrt(fan_in)
        params[f"w{idx}"] = jax.random.uniform(
            kw, (fan_in, fan_out), jnp.float32, -bound, bound)
        params[f"b{idx}"] = jax.random.uniform(
            kb, (1, fan_out), jnp.float32, -bound, bound)
    return params


def reference_forward(x, params):
    """Eval-mode reference using the same bf16 matmul operands / f32 accumulation."""
    h = x
    for i in range(1, 4):
        w = params[f"w{i}"].astype(jnp.bfloat16)
        h = jnp.dot(h.astype(jnp.bfloat16), w,
                    preferred_element_type=jnp.float32)
        h = jnp.maximum(h + params[f"b{i}"], 0.0)
    z = jnp.dot(h.astype(jnp.bfloat16), params["w4"].astype(jnp.bfloat16),
                preferred_element_type=jnp.float32) + params["b4"]
    return jax.nn.log_softmax(z, axis=1)


if __name__ == "__main__":
    key = jax.random.PRNGKey(0)
    kx, kp = jax.random.split(key)
    B = 16  # batch; each example flattened to 784 (e.g. 1x28x28 MNIST image)
    x = jax.random.normal(kx, (B, 784), jnp.float32)
    params = init_params(kp)
    prepped = prepare_params(params)   # one-time model-load prep

    out = network_forward(x, prepped)
    out = jax.block_until_ready(out)

    ref = reference_forward(x, params)
    assert out.shape == (B, 10)
    assert jnp.allclose(out, ref, atol=5e-3, rtol=5e-3), "mismatch vs reference"
    print("KERNEL_OK")
</pallas_src>

<mosaic_0001>
module attributes {stable_mosaic.version = 11 : i64} {
  func.func @mlp_kernel(%arg0: i32, %arg1: memref<16x784xf32, #tpu.memory_space<vmem>>, %arg2: memref<784x256xbf16, #tpu.memory_space<vmem>>, %arg3: memref<1x256xf32, #tpu.memory_space<vmem>>, %arg4: memref<256x128xbf16, #tpu.memory_space<vmem>>, %arg5: memref<1x128xf32, #tpu.memory_space<vmem>>, %arg6: memref<128x128xbf16, #tpu.memory_space<vmem>>, %arg7: memref<1x128xf32, #tpu.memory_space<vmem>>, %arg8: memref<128x128xbf16, #tpu.memory_space<vmem>>, %arg9: memref<1x128xf32, #tpu.memory_space<vmem>>, %arg10: memref<16x128xf32, #tpu.memory_space<vmem>>) attributes {dimension_semantics = [#tpu.dimension_semantics<parallel>], iteration_bounds = array<i64: 1>, scalar_prefetch = 0 : i64, scratch_operands = 0 : i64, tpu.core_type = #tpu.core_type<tc>, window_params = [{transform_indices = @transform_0, window_bounds = array<i64: 16, 784>}, {pipeline_mode = #tpu.pipeline_mode<synchronous>, transform_indices = @transform_1, window_bounds = array<i64: 784, 256>}, {pipeline_mode = #tpu.pipeline_mode<synchronous>, transform_indices = @transform_2, window_bounds = array<i64: 1, 256>}, {pipeline_mode = #tpu.pipeline_mode<synchronous>, transform_indices = @transform_3, window_bounds = array<i64: 256, 128>}, {pipeline_mode = #tpu.pipeline_mode<synchronous>, transform_indices = @transform_4, window_bounds = array<i64: 1, 128>}, {pipeline_mode = #tpu.pipeline_mode<synchronous>, transform_indices = @transform_5, window_bounds = array<i64: 128, 128>}, {pipeline_mode = #tpu.pipeline_mode<synchronous>, transform_indices = @transform_6, window_bounds = array<i64: 1, 128>}, {pipeline_mode = #tpu.pipeline_mode<synchronous>, transform_indices = @transform_7, window_bounds = array<i64: 128, 128>}, {pipeline_mode = #tpu.pipeline_mode<synchronous>, transform_indices = @transform_8, window_bounds = array<i64: 1, 128>}, {transform_indices = @transform_9, window_bounds = array<i64: 16, 128>}]} {
    %c0 = arith.constant 0 : index
    %c0_0 = arith.constant 0 : index
    %0 = vector.load %arg1[%c0, %c0_0] : memref<16x784xf32, #tpu.memory_space<vmem>>, vector<16x784xf32>
    %1 = arith.truncf %0 : vector<16x784xf32> to vector<16x784xbf16>
    %c0_1 = arith.constant 0 : index
    %c0_2 = arith.constant 0 : index
    %2 = vector.load %arg2[%c0_1, %c0_2] : memref<784x256xbf16, #tpu.memory_space<vmem>>, vector<784x256xbf16>
    %cst = arith.constant dense<0.000000e+00> : vector<16x256xf32>
    %3 = tpu.matmul %1, %2, %cst {dimension_numbers = #tpu.dot_dimension_numbers<[1], [0], [0], [1], [0, 0, 1, 1], [], []>} : vector<16x784xbf16>, vector<784x256xbf16>, vector<16x256xf32> -> vector<16x256xf32>
    %c0_3 = arith.constant 0 : index
    %c0_4 = arith.constant 0 : index
    %4 = vector.load %arg3[%c0_3, %c0_4] : memref<1x256xf32, #tpu.memory_space<vmem>>, vector<1x256xf32>
    %5 = vector.broadcast %4 : vector<1x256xf32> to vector<16x256xf32>
    %6 = arith.addf %3, %5 : vector<16x256xf32>
    %cst_5 = arith.constant 0.000000e+00 : f32
    %7 = vector.broadcast %cst_5 : f32 to vector<16x256xf32>
    %8 = arith.maximumf %6, %7 : vector<16x256xf32>
    %9 = arith.truncf %8 : vector<16x256xf32> to vector<16x256xbf16>
    %c0_6 = arith.constant 0 : index
    %c0_7 = arith.constant 0 : index
    %10 = vector.load %arg4[%c0_6, %c0_7] : memref<256x128xbf16, #tpu.memory_space<vmem>>, vector<256x128xbf16>
    %cst_8 = arith.constant dense<0.000000e+00> : vector<16x128xf32>
    %11 = tpu.matmul %9, %10, %cst_8 {dimension_numbers = #tpu.dot_dimension_numbers<[1], [0], [0], [1], [0, 0, 1, 1], [], []>} : vector<16x256xbf16>, vector<256x128xbf16>, vector<16x128xf32> -> vector<16x128xf32>
    %c0_9 = arith.constant 0 : index
    %c0_10 = arith.constant 0 : index
    %12 = vector.load %arg5[%c0_9, %c0_10] : memref<1x128xf32, #tpu.memory_space<vmem>>, vector<1x128xf32>
    %13 = vector.broadcast %12 : vector<1x128xf32> to vector<16x128xf32>
    %14 = arith.addf %11, %13 : vector<16x128xf32>
    %cst_11 = arith.constant 0.000000e+00 : f32
    %15 = vector.broadcast %cst_11 : f32 to vector<16x128xf32>
    %16 = arith.maximumf %14, %15 : vector<16x128xf32>
    %17 = arith.truncf %16 : vector<16x128xf32> to vector<16x128xbf16>
    %c0_12 = arith.constant 0 : index
    %c0_13 = arith.constant 0 : index
    %18 = vector.load %arg6[%c0_12, %c0_13] : memref<128x128xbf16, #tpu.memory_space<vmem>>, vector<128x128xbf16>
    %cst_14 = arith.constant dense<0.000000e+00> : vector<16x128xf32>
    %19 = tpu.matmul %17, %18, %cst_14 {dimension_numbers = #tpu.dot_dimension_numbers<[1], [0], [0], [1], [0, 0, 1, 1], [], []>} : vector<16x128xbf16>, vector<128x128xbf16>, vector<16x128xf32> -> vector<16x128xf32>
    %c0_15 = arith.constant 0 : index
    %c0_16 = arith.constant 0 : index
    %20 = vector.load %arg7[%c0_15, %c0_16] : memref<1x128xf32, #tpu.memory_space<vmem>>, vector<1x128xf32>
    %21 = vector.broadcast %20 : vector<1x128xf32> to vector<16x128xf32>
    %22 = arith.addf %19, %21 : vector<16x128xf32>
    %cst_17 = arith.constant 0.000000e+00 : f32
    %23 = vector.broadcast %cst_17 : f32 to vector<16x128xf32>
    %24 = arith.maximumf %22, %23 : vector<16x128xf32>
    %25 = arith.truncf %24 : vector<16x128xf32> to vector<16x128xbf16>
    %c0_18 = arith.constant 0 : index
    %c0_19 = arith.constant 0 : index
    %26 = vector.load %arg8[%c0_18, %c0_19] : memref<128x128xbf16, #tpu.memory_space<vmem>>, vector<128x128xbf16>
    %cst_20 = arith.constant dense<0.000000e+00> : vector<16x128xf32>
    %27 = tpu.matmul %25, %26, %cst_20 {dimension_numbers = #tpu.dot_dimension_numbers<[1], [0], [0], [1], [0, 0, 1, 1], [], []>} : vector<16x128xbf16>, vector<128x128xbf16>, vector<16x128xf32> -> vector<16x128xf32>
    %c0_21 = arith.constant 0 : index
    %c0_22 = arith.constant 0 : index
    %28 = vector.load %arg9[%c0_21, %c0_22] : memref<1x128xf32, #tpu.memory_space<vmem>>, vector<1x128xf32>
    %29 = vector.broadcast %28 : vector<1x128xf32> to vector<16x128xf32>
    %30 = arith.addf %27, %29 : vector<16x128xf32>
    %cst_23 = arith.constant dense<0xFF800000> : vector<16xf32>
    %31 = vector.multi_reduction <maximumf>, %30, %cst_23 [1] : vector<16x128xf32> to vector<16xf32>
    %32 = vector.shape_cast %31 : vector<16xf32> to vector<16x1xf32>
    %33 = vector.broadcast %32 : vector<16x1xf32> to vector<16x128xf32>
    %34 = arith.subf %30, %33 : vector<16x128xf32>
    %35 = math.exp %34 : vector<16x128xf32>
    %cst_24 = arith.constant dense<0.000000e+00> : vector<16xf32>
    %36 = vector.multi_reduction <add>, %35, %cst_24 [1] : vector<16x128xf32> to vector<16xf32>
    %37 = vector.shape_cast %36 : vector<16xf32> to vector<16x1xf32>
    %38 = math.log %37 : vector<16x1xf32>
    %39 = vector.broadcast %38 : vector<16x1xf32> to vector<16x128xf32>
    %40 = arith.subf %34, %39 : vector<16x128xf32>
    %c0_25 = arith.constant 0 : index
    %c0_26 = arith.constant 0 : index
    %41 = vector.load %arg10[%c0_25, %c0_26] : memref<16x128xf32, #tpu.memory_space<vmem>>, vector<16x128xf32>
    tpu.vector_store %arg10[%c0_25, %c0_26], %40 {strides = array<i32>} : memref<16x128xf32, #tpu.memory_space<vmem>>, vector<16x128xf32>,
    return
  }
  func.func @transform_0(%arg0: i32) -> (i32, i32) {
    %c0_i32 = arith.constant 0 : i32
    %c0_i32_0 = arith.constant 0 : i32
    return %arg0, %c0_i32 : i32, i32
  }
  func.func @transform_1(%arg0: i32) -> (i32, i32) {
    %c0_i32 = arith.constant 0 : i32
    %c0_i32_0 = arith.constant 0 : i32
    %c0_i32_1 = arith.constant 0 : i32
    return %c0_i32, %c0_i32_0 : i32, i32
  }
  func.func @transform_2(%arg0: i32) -> (i32, i32) {
    %c0_i32 = arith.constant 0 : i32
    %c0_i32_0 = arith.constant 0 : i32
    %c0_i32_1 = arith.constant 0 : i32
    return %c0_i32, %c0_i32_0 : i32, i32
  }
  func.func @transform_3(%arg0: i32) -> (i32, i32) {
    %c0_i32 = arith.constant 0 : i32
    %c0_i32_0 = arith.constant 0 : i32
    %c0_i32_1 = arith.constant 0 : i32
    return %c0_i32, %c0_i32_0 : i32, i32
  }
  func.func @transform_4(%arg0: i32) -> (i32, i32) {
    %c0_i32 = arith.constant 0 : i32
    %c0_i32_0 = arith.constant 0 : i32
    %c0_i32_1 = arith.constant 0 : i32
    return %c0_i32, %c0_i32_0 : i32, i32
  }
  func.func @transform_5(%arg0: i32) -> (i32, i32) {
    %c0_i32 = arith.constant 0 : i32
    %c0_i32_0 = arith.constant 0 : i32
    %c0_i32_1 = arith.constant 0 : i32
    return %c0_i32, %c0_i32_0 : i32, i32
  }
  func.func @transform_6(%arg0: i32) -> (i32, i32) {
    %c0_i32 = arith.constant 0 : i32
    %c0_i32_0 = arith.constant 0 : i32
    %c0_i32_1 = arith.constant 0 : i32
    return %c0_i32, %c0_i32_0 : i32, i32
  }
  func.func @transform_7(%arg0: i32) -> (i32, i32) {
    %c0_i32 = arith.constant 0 : i32
    %c0_i32_0 = arith.constant 0 : i32
    %c0_i32_1 = arith.constant 0 : i32
    return %c0_i32, %c0_i32_0 : i32, i32
  }
  func.func @transform_8(%arg0: i32) -> (i32, i32) {
    %c0_i32 = arith.constant 0 : i32
    %c0_i32_0 = arith.constant 0 : i32
    %c0_i32_1 = arith.constant 0 : i32
    return %c0_i32, %c0_i32_0 : i32, i32
  }
  func.func @transform_9(%arg0: i32) -> (i32, i32) {
    %c0_i32 = arith.constant 0 : i32
    %c0_i32_0 = arith.constant 0 : i32
    return %arg0, %c0_i32 : i32, i32
  }
}

</mosaic_0001>

<llo_original>
// kernel: tpu_custom_call.1
$region0: #{tpu_custom_call.1}
  #allocation0 [shape = 'u32[]', space=smem, size = 0x4, offset = 0x4, fixed_abs, tag = 'smem constant byte address 0x4 - core index']
  #allocation1 [shape = 'u32[72,128]{1,0:T(1,128)}', space=vmem, size = 0x9000, scoped, tag = 'internal scratch']
  %s0 = inlined_call_operand.hbm [shape: f32[16,784], index: 0, kind: input, shape index: {}]
  %s1 = inlined_call_operand.hbm [shape: bf16[784,256], index: 1, kind: input, shape index: {}]
  %s2 = inlined_call_operand.hbm [shape: f32[1,256], index: 2, kind: input, shape index: {}]
  %s3 = inlined_call_operand.hbm [shape: bf16[256,128], index: 3, kind: input, shape index: {}]
  %s4 = inlined_call_operand.vmem [shape: f32[1,128], index: 4, kind: input, shape index: {}]
  %s5 = inlined_call_operand.hbm [shape: bf16[128,128], index: 5, kind: input, shape index: {}]
  %s6 = inlined_call_operand.vmem [shape: f32[1,128], index: 6, kind: input, shape index: {}]
  %s7 = inlined_call_operand.hbm [shape: bf16[128,128], index: 7, kind: input, shape index: {}]
  %s8 = inlined_call_operand.vmem [shape: f32[1,128], index: 8, kind: input, shape index: {}]
  %s9 = inlined_call_operand.hbm [shape: f32[16,128], index: 9, kind: output, shape index: {}]
  %s10 = sld [smem:[#allocation0]]
  $region70: #{tpu_custom_call.1} parent=0
    _
  %s12 = ssub.s32 1, %s10
  %s13 = scalar_select 0, %s12, %s10
  $region1: #{tpu_custom_call.1} parent=0
    #allocation2 [shape = 'u8[57344]{0}', space=vmem, size = 0xe000, scoped, tag = 'input window, operand 0, single buffered']
    #allocation3 [shape = 's32[1]{0}', space=sflag, size = 0x4, scoped, tag = 'scoped memory for tpu_custom_call.1']
    #allocation4 [shape = 's32[1]{0}', space=sflag, size = 0x4, scoped, tag = 'scoped memory for tpu_custom_call.1']
    #allocation5 [shape = 'u8[401408]{0}', space=vmem, size = 0x62000, scoped, tag = 'input window, operand 1, single buffered']
    #allocation6 [shape = 's32[1]{0}', space=sflag, size = 0x4, scoped, tag = 'scoped memory for tpu_custom_call.1']
    #allocation7 [shape = 'u8[1024]{0}', space=vmem, size = 0x400, scoped, tag = 'input window, operand 2, single buffered']
    #allocation8 [shape = 'u8[65536]{0}', space=vmem, size = 0x10000, scoped, tag = 'input window, operand 3, single buffered']
    #allocation9 [shape = 's32[1]{0}', space=sflag, size = 0x4, scoped, tag = 'scoped memory for tpu_custom_call.1']
    #allocation10 [shape = 'u8[32768]{0}', space=vmem, size = 0x8000, scoped, tag = 'input window, operand 5, single buffered']
    #allocation11 [shape = 'u8[32768]{0}', space=vmem, size = 0x8000, scoped, tag = 'input window, operand 7, single buffered']
    #allocation12 [shape = 's32[1]{0}', space=sflag, size = 0x4, scoped, tag = 'scoped memory for tpu_custom_call.1']
    #allocation13 [shape = 'u8[8192]{0}', space=vmem, size = 0x2000, scoped, tag = 'output window, operand 0, single buffered']
    %14 = vsyncpa [#allocation3], 0
    %15 = vsyncpa [#allocation6], 0
    %16 = vsyncpa [#allocation9], 0
    %17 = vsyncpa [#allocation12], 0
    %18 = vsyncpa [#allocation4], 0
    // Predicated region
    $region2: #{tpu_custom_call.1} parent=1 // pred_check
      _
    $region3: #{tpu_custom_call.1} parent=1 // pred_check_branch
      %20 = sbr.rel (0) target = $region5
    $region4: #{tpu_custom_call.1} parent=1 // pred_region
      %22 = vsyncadd [#allocation3], 0
      %s23 = sshll.u32 %s0, 4
      %s24 = int_to_ptr.hbm [resolvable:$true] %s23
      %s25 = sshll.u32 [#allocation2], 4
      %s26 = int_to_ptr.vmem [resolvable:$true] %s25
      %31 = dma.hbm_to_vmem [thread:$0]  %s24, 1792, %s26, [#allocation3], 896, 896, 56
    $region5: #{tpu_custom_call.1} parent=1 // pred_fallthru
      _
    // Predicated region
    $region6: #{tpu_custom_call.1} parent=1 // pred_check
      _
    $region7: #{tpu_custom_call.1} parent=1 // pred_check_branch
      %33 = sbr.rel (0) target = $region9
    $region8: #{tpu_custom_call.1} parent=1 // pred_region
      %35 = vsyncadd [#allocation6], 0
      %s36 = sshll.u32 %s1, 4
      %s37 = int_to_ptr.hbm [resolvable:$true] %s36
      %s38 = sshll.u32 [#allocation5], 4
      %s39 = int_to_ptr.vmem [resolvable:$true] %s38
      %44 = dma.hbm_to_vmem [thread:$0]  %s37, 12544, %s39, [#allocation6], 128, 128, 8
    $region9: #{tpu_custom_call.1} parent=1 // pred_fallthru
      _
    // Predicated region
    $region10: #{tpu_custom_call.1} parent=1 // pred_check
      _
    $region11: #{tpu_custom_call.1} parent=1 // pred_check_branch
      %46 = sbr.rel (0) target = $region13
    $region12: #{tpu_custom_call.1} parent=1 // pred_region
      %48 = vsyncadd [#allocation6], 0
      %s50 = sshll.u32 %s2, 4
      %s51 = int_to_ptr.hbm [resolvable:$true] %s50
      %s52 = sshll.u32 [#allocation7], 4
      %s53 = int_to_ptr.vmem [resolvable:$true] %s52
      %55 = dma.hbm_to_vmem [thread:$0]  %s51, 32, %s53, [#allocation6]
    $region13: #{tpu_custom_call.1} parent=1 // pred_fallthru
      _
    // Predicated region
    $region14: #{tpu_custom_call.1} parent=1 // pred_check
      _
    $region15: #{tpu_custom_call.1} parent=1 // pred_check_branch
      %57 = sbr.rel (0) target = $region17
    $region16: #{tpu_custom_call.1} parent=1 // pred_region
      %59 = vsyncadd [#allocation9], 0
      %s60 = sshll.u32 %s3, 4
      %s61 = int_to_ptr.hbm [resolvable:$true] %s60
      %s62 = sshll.u32 [#allocation8], 4
      %s63 = int_to_ptr.vmem [resolvable:$true] %s62
      %68 = dma.hbm_to_vmem [thread:$0]  %s61, 2048, %s63, [#allocation9], 64, 64, 4
    $region17: #{tpu_custom_call.1} parent=1 // pred_fallthru
      _
    // Predicated region
    $region18: #{tpu_custom_call.1} parent=1 // pred_check
      _
    $region19: #{tpu_custom_call.1} parent=1 // pred_check_branch
      %70 = sbr.rel (0) target = $region21
    $region20: #{tpu_custom_call.1} parent=1 // pred_region
      _
    $region21: #{tpu_custom_call.1} parent=1 // pred_fallthru
      _
    // Predicated region
    $region22: #{tpu_custom_call.1} parent=1 // pred_check
      _
    $region23: #{tpu_custom_call.1} parent=1 // pred_check_branch
      %72 = sbr.rel (0) target = $region25
    $region24: #{tpu_custom_call.1} parent=1 // pred_region
      %74 = vsyncadd [#allocation9], 0
      %s75 = sshll.u32 %s5, 4
      %s76 = int_to_ptr.hbm [resolvable:$true] %s75
      %s77 = sshll.u32 [#allocation10], 4
      %s78 = int_to_ptr.vmem [resolvable:$true] %s77
      %83 = dma.hbm_to_vmem [thread:$0]  %s76, 1024, %s78, [#allocation9], 64, 64, 4
    $region25: #{tpu_custom_call.1} parent=1 // pred_fallthru
      _
    // Predicated region
    $region26: #{tpu_custom_call.1} parent=1 // pred_check
      _
    $region27: #{tpu_custom_call.1} parent=1 // pred_check_branch
      %85 = sbr.rel (0) target = $region29
    $region28: #{tpu_custom_call.1} parent=1 // pred_region
      _
    $region29: #{tpu_custom_call.1} parent=1 // pred_fallthru
      _
    // Predicated region
    $region30: #{tpu_custom_call.1} parent=1 // pred_check
      _
    $region31: #{tpu_custom_call.1} parent=1 // pred_check_branch
      %87 = sbr.rel (0) target = $region33
    $region32: #{tpu_custom_call.1} parent=1 // pred_region
      %89 = vsyncadd [#allocation12], 0
      %s90 = sshll.u32 %s7, 4
      %s91 = int_to_ptr.hbm [resolvable:$true] %s90
      %s92 = sshll.u32 [#allocation11], 4
      %s93 = int_to_ptr.vmem [resolvable:$true] %s92
      %98 = dma.hbm_to_vmem [thread:$0]  %s91, 1024, %s93, [#allocation12], 64, 64, 4
    $region33: #{tpu_custom_call.1} parent=1 // pred_fallthru
      _
    // Predicated region
    $region34: #{tpu_custom_call.1} parent=1 // pred_check
      _
    $region35: #{tpu_custom_call.1} parent=1 // pred_check_branch
      %100 = sbr.rel (0) target = $region37
    $region36: #{tpu_custom_call.1} parent=1 // pred_region
      _
    $region37: #{tpu_custom_call.1} parent=1 // pred_fallthru
      _
    // Predicated region
    $region38: #{tpu_custom_call.1} parent=1 // pred_check
      _
    $region39: #{tpu_custom_call.1} parent=1 // pred_check_branch
      %102 = sbr.rel (0) target = $region41
    $region40: #{tpu_custom_call.1} parent=1 // pred_region
      %104 = dma.done [#allocation3], 1792
    $region41: #{tpu_custom_call.1} parent=1 // pred_fallthru
      _
    // Predicated region
    $region42: #{tpu_custom_call.1} parent=1 // pred_check
      _
    $region43: #{tpu_custom_call.1} parent=1 // pred_check_branch
      %106 = sbr.rel (0) target = $region45
    $region44: #{tpu_custom_call.1} parent=1 // pred_region
      %108 = dma.done [#allocation6], 12544
    $region45: #{tpu_custom_call.1} parent=1 // pred_fallthru
      _
    // Predicated region
    $region46: #{tpu_custom_call.1} parent=1 // pred_check
      _
    $region47: #{tpu_custom_call.1} parent=1 // pred_check_branch
      %110 = sbr.rel (0) target = $region49
    $region48: #{tpu_custom_call.1} parent=1 // pred_region
      %112 = dma.done [#allocation6], 32
    $region49: #{tpu_custom_call.1} parent=1 // pred_fallthru
      _
    // Predicated region
    $region50: #{tpu_custom_call.1} parent=1 // pred_check
      _
    $region51: #{tpu_custom_call.1} parent=1 // pred_check_branch
      %114 = sbr.rel (0) target = $region53
    $region52: #{tpu_custom_call.1} parent=1 // pred_region
      %116 = dma.done [#allocation9], 2048
    $region53: #{tpu_custom_call.1} parent=1 // pred_fallthru
      _
    // Predicated region
    $region54: #{tpu_custom_call.1} parent=1 // pred_check
      _
    $region55: #{tpu_custom_call.1} parent=1 // pred_check_branch
      %118 = sbr.rel (0) target = $region57
    $region56: #{tpu_custom_call.1} parent=1 // pred_region
      %120 = dma.done [#allocation9], 1024
    $region57: #{tpu_custom_call.1} parent=1 // pred_fallthru
      _
    // Predicated region
    $region58: #{tpu_custom_call.1} parent=1 // pred_check
      _
    $region59: #{tpu_custom_call.1} parent=1 // pred_check_branch
      %122 = sbr.rel (0) target = $region61
    $region60: #{tpu_custom_call.1} parent=1 // pred_region
      %124 = dma.done [#allocation12], 1024
    $region61: #{tpu_custom_call.1} parent=1 // pred_fallthru
      _
    %v126 = vld [vmem:[#allocation2] sm:$0xff]
    %v127 = vld [vmem:[#allocation2 + $0x8] sm:$0xff]
    %v128 = vld [vmem:[#allocation2 + $0x10] sm:$0xff]
    %v129 = vld [vmem:[#allocation2 + $0x18] sm:$0xff]
    %v130 = vld [vmem:[#allocation2 + $0x20] sm:$0xff]
    %v131 = vld [vmem:[#allocation2 + $0x28] sm:$0xff]
    %v132 = vld [vmem:[#allocation2 + $0x30] sm:$0xff]
    %v133 = vld [vmem:[#allocation2 + $0x38] sm:$0xff]
    %v134 = vld [vmem:[#allocation2 + $0x40] sm:$0xff]
    %v135 = vld [vmem:[#allocation2 + $0x48] sm:$0xff]
    %v136 = vld [vmem:[#allocation2 + $0x50] sm:$0xff]
    %v137 = vld [vmem:[#allocation2 + $0x58] sm:$0xff]
    %v138 = vld [vmem:[#allocation2 + $0x60] sm:$0xff]
    %v139 = vld [vmem:[#allocation2 + $0x68] sm:$0xff]
    %v140 = vpack.c.bf16 %v133, %v126
    %v141 = vpack.c.bf16 %v134, %v127
    %v142 = vpack.c.bf16 %v135, %v128
    %v143 = vpack.c.bf16 %v136, %v129
    %v144 = vpack.c.bf16 %v137, %v130
    %v145 = vpack.c.bf16 %v138, %v131
    %v146 = vpack.c.bf16 %v139, %v132
    %v147 = vld [vmem:[#allocation5] sm:$0xff]
    %v148 = vld [vmem:[#allocation5 + $0x8] sm:$0xff]
    %v149 = vld [vmem:[#allocation5 + $0x10] sm:$0xff]
    %v150 = vld [vmem:[#allocation5 + $0x18] sm:$0xff]
    %v151 = vld [vmem:[#allocation5 + $0x20] sm:$0xff]
    %v152 = vld [vmem:[#allocation5 + $0x28] sm:$0xff]
    %v153 = vld [vmem:[#allocation5 + $0x30] sm:$0xff]
    %v154 = vld [vmem:[#allocation5 + $0x38] sm:$0xff]
    %v155 = vld [vmem:[#allocation5 + $0x40] sm:$0xff]
    %v156 = vld [vmem:[#allocation5 + $0x48] sm:$0xff]
    %v157 = vld [vmem:[#allocation5 + $0x50] sm:$0xff]
    %v158 = vld [vmem:[#allocation5 + $0x58] sm:$0xff]
    %v159 = vld [vmem:[#allocation5 + $0x60] sm:$0xff]
    %v160 = vld [vmem:[#allocation5 + $0x68] sm:$0xff]
    %v161 = vld [vmem:[#allocation5 + $0x70] sm:$0xff]
    %v162 = vld [vmem:[#allocation5 + $0x78] sm:$0xff]
    %v163 = vld [vmem:[#allocation5 + $0x80] sm:$0xff]
    %v164 = vld [vmem:[#allocation5 + $0x88] sm:$0xff]
    %v165 = vld [vmem:[#allocation5 + $0x90] sm:$0xff]
    %v166 = vld [vmem:[#allocation5 + $0x98] sm:$0xff]
    %v167 = vld [vmem:[#allocation5 + $0xa0] sm:$0xff]
    %v168 = vld [vmem:[#allocation5 + $0xa8] sm:$0xff]
    %v169 = vld [vmem:[#allocation5 + $0xb0] sm:$0xff]
    %v170 = vld [vmem:[#allocation5 + $0xb8] sm:$0xff]
    %v171 = vld [vmem:[#allocation5 + $0xc0] sm:$0xff]
    %v172 = vld [vmem:[#allocation5 + $0xc8] sm:$0xff]
    %v173 = vld [vmem:[#allocation5 + $0xd0] sm:$0xff]
    %v174 = vld [vmem:[#allocation5 + $0xd8] sm:$0xff]
    %v175 = vld [vmem:[#allocation5 + $0xe0] sm:$0xff]
    %v176 = vld [vmem:[#allocation5 + $0xe8] sm:$0xff]
    %v177 = vld [vmem:[#allocation5 + $0xf0] sm:$0xff]
    %v178 = vld [vmem:[#allocation5 + $0xf8] sm:$0xff]
    %v179 = vld [vmem:[#allocation5 + $0x100] sm:$0xff]
    %v180 = vld [vmem:[#allocation5 + $0x108] sm:$0xff]
    %v181 = vld [vmem:[#allocation5 + $0x110] sm:$0xff]
    %v182 = vld [vmem:[#allocation5 + $0x118] sm:$0xff]
    %v183 = vld [vmem:[#allocation5 + $0x120] sm:$0xff]
    %v184 = vld [vmem:[#allocation5 + $0x128] sm:$0xff]
    %v185 = vld [vmem:[#allocation5 + $0x130] sm:$0xff]
    %v186 = vld [vmem:[#allocation5 + $0x138] sm:$0xff]
    %v187 = vld [vmem:[#allocation5 + $0x140] sm:$0xff]
    %v188 = vld [vmem:[#allocation5 + $0x148] sm:$0xff]
    %v189 = vld [vmem:[#allocation5 + $0x150] sm:$0xff]
    %v190 = vld [vmem:[#allocation5 + $0x158] sm:$0xff]
    %v191 = vld [vmem:[#allocation5 + $0x160] sm:$0xff]
    %v192 = vld [vmem:[#allocation5 + $0x168] sm:$0xff]
    %v193 = vld [vmem:[#allocation5 + $0x170] sm:$0xff]
    %v194 = vld [vmem:[#allocation5 + $0x178] sm:$0xff]
    %v195 = vld [vmem:[#allocation5 + $0x180] sm:$0xff]
    %v196 = vld [vmem:[#allocation5 + $0x188] sm:$0xff]
    %v197 = vld [vmem:[#allocation5 + $0x190] sm:$0xff]
    %v198 = vld [vmem:[#allocation5 + $0x198] sm:$0xff]
    %v199 = vld [vmem:[#allocation5 + $0x1a0] sm:$0xff]
    %v200 = vld [vmem:[#allocation5 + $0x1a8] sm:$0xff]
    %v201 = vld [vmem:[#allocation5 + $0x1b0] sm:$0xff]
    %v202 = vld [vmem:[#allocation5 + $0x1b8] sm:$0xff]
    %v203 = vld [vmem:[#allocation5 + $0x1c0] sm:$0xff]
    %v204 = vld [vmem:[#allocation5 + $0x1c8] sm:$0xff]
    %v205 = vld [vmem:[#allocation5 + $0x1d0] sm:$0xff]
    %v206 = vld [vmem:[#allocation5 + $0x1d8] sm:$0xff]
    %v207 = vld [vmem:[#allocation5 + $0x1e0] sm:$0xff]
    %v208 = vld [vmem:[#allocation5 + $0x1e8] sm:$0xff]
    %v209 = vld [vmem:[#allocation5 + $0x1f0] sm:$0xff]
    %v210 = vld [vmem:[#allocation5 + $0x1f8] sm:$0xff]
    %v211 = vld [vmem:[#allocation5 + $0x200] sm:$0xff]
    %v212 = vld [vmem:[#allocation5 + $0x208] sm:$0xff]
    %v213 = vld [vmem:[#allocation5 + $0x210] sm:$0xff]
    %v214 = vld [vmem:[#allocation5 + $0x218] sm:$0xff]
    %v215 = vld [vmem:[#allocation5 + $0x220] sm:$0xff]
    %v216 = vld [vmem:[#allocation5 + $0x228] sm:$0xff]
    %v217 = vld [vmem:[#allocation5 + $0x230] sm:$0xff]
    %v218 = vld [vmem:[#allocation5 + $0x238] sm:$0xff]
    %v219 = vld [vmem:[#allocation5 + $0x240] sm:$0xff]
    %v220 = vld [vmem:[#allocation5 + $0x248] sm:$0xff]
    %v221 = vld [vmem:[#allocation5 + $0x250] sm:$0xff]
    %v222 = vld [vmem:[#allocation5 + $0x258] sm:$0xff]
    %v223 = vld [vmem:[#allocation5 + $0x260] sm:$0xff]
    %v224 = vld [vmem:[#allocation5 + $0x268] sm:$0xff]
    %v225 = vld [vmem:[#allocation5 + $0x270] sm:$0xff]
    %v226 = vld [vmem:[#allocation5 + $0x278] sm:$0xff]
    %v227 = vld [vmem:[#allocation5 + $0x280] sm:$0xff]
    %v228 = vld [vmem:[#allocation5 + $0x288] sm:$0xff]
    %v229 = vld [vmem:[#allocation5 + $0x290] sm:$0xff]
    %v230 = vld [vmem:[#allocation5 + $0x298] sm:$0xff]
    %v231 = vld [vmem:[#allocation5 + $0x2a0] sm:$0xff]
    %v232 = vld [vmem:[#allocation5 + $0x2a8] sm:$0xff]
    %v233 = vld [vmem:[#allocation5 + $0x2b0] sm:$0xff]
    %v234 = vld [vmem:[#allocation5 + $0x2b8] sm:$0xff]
    %v235 = vld [vmem:[#allocation5 + $0x2c0] sm:$0xff]
    %v236 = vld [vmem:[#allocation5 + $0x2c8] sm:$0xff]
    %v237 = vld [vmem:[#allocation5 + $0x2d0] sm:$0xff]
    %v238 = vld [vmem:[#allocation5 + $0x2d8] sm:$0xff]
    %v239 = vld [vmem:[#allocation5 + $0x2e0] sm:$0xff]
    %v240 = vld [vmem:[#allocation5 + $0x2e8] sm:$0xff]
    %v241 = vld [vmem:[#allocation5 + $0x2f0] sm:$0xff]
    %v242 = vld [vmem:[#allocation5 + $0x2f8] sm:$0xff]
    %v243 = vld [vmem:[#allocation5 + $0x300] sm:$0xff]
    %v244 = vld [vmem:[#allocation5 + $0x308] sm:$0xff]
    %v245 = vld [vmem:[#allocation7] sm:$0x3]
    %v247 = vperm.slane %v245, 0
    %v248 = vperm.slane %v245, 1
    %v349 = vunpack.c.l.b16 %v147
    %v350 = vunpack.c.h.b16 %v147
    %v351 = vunpack.c.l.b16 %v148
    %v352 = vunpack.c.h.b16 %v148
    %v353 = vunpack.c.l.b16 %v149
    %v354 = vunpack.c.h.b16 %v149
    %v355 = vunpack.c.l.b16 %v150
    %v356 = vunpack.c.h.b16 %v150
    %v357 = vunpack.c.l.b16 %v151
    %v358 = vunpack.c.h.b16 %v151
    %v359 = vunpack.c.l.b16 %v152
    %v360 = vunpack.c.h.b16 %v152
    %v361 = vunpack.c.l.b16 %v153
    %v362 = vunpack.c.h.b16 %v153
    %v363 = vunpack.c.l.b16 %v154
    %v364 = vunpack.c.h.b16 %v154
    %v365 = vunpack.c.l.b16 %v155
    %v366 = vunpack.c.h.b16 %v155
    %v367 = vunpack.c.l.b16 %v156
    %v368 = vunpack.c.h.b16 %v156
    %v369 = vunpack.c.l.b16 %v157
    %v370 = vunpack.c.h.b16 %v157
    %v371 = vunpack.c.l.b16 %v158
    %v372 = vunpack.c.h.b16 %v158
    %v373 = vunpack.c.l.b16 %v159
    %v374 = vunpack.c.h.b16 %v159
    %v375 = vunpack.c.l.b16 %v160
    %v376 = vunpack.c.h.b16 %v160
    %v377 = vunpack.c.l.b16 %v161
    %v378 = vunpack.c.h.b16 %v161
    %v379 = vunpack.c.l.b16 %v162
    %v380 = vunpack.c.h.b16 %v162
    %v381 = vunpack.c.l.b16 %v163
    %v382 = vunpack.c.h.b16 %v163
    %v383 = vunpack.c.l.b16 %v164
    %v384 = vunpack.c.h.b16 %v164
    %v385 = vunpack.c.l.b16 %v165
    %v386 = vunpack.c.h.b16 %v165
    %v387 = vunpack.c.l.b16 %v166
    %v388 = vunpack.c.h.b16 %v166
    %v389 = vunpack.c.l.b16 %v167
    %v390 = vunpack.c.h.b16 %v167
    %v391 = vunpack.c.l.b16 %v168
    %v392 = vunpack.c.h.b16 %v168
    %v393 = vunpack.c.l.b16 %v169
    %v394 = vunpack.c.h.b16 %v169
    %v395 = vunpack.c.l.b16 %v170
    %v396 = vunpack.c.h.b16 %v170
    %v397 = vunpack.c.l.b16 %v171
    %v398 = vunpack.c.h.b16 %v171
    %v399 = vunpack.c.l.b16 %v172
    %v400 = vunpack.c.h.b16 %v172
    %v401 = vunpack.c.l.b16 %v173
    %v402 = vunpack.c.h.b16 %v173
    %v403 = vunpack.c.l.b16 %v174
    %v404 = vunpack.c.h.b16 %v174
    %v405 = vunpack.c.l.b16 %v175
    %v406 = vunpack.c.h.b16 %v175
    %v407 = vunpack.c.l.b16 %v176
    %v408 = vunpack.c.h.b16 %v176
    %v409 = vunpack.c.l.b16 %v177
    %v410 = vunpack.c.h.b16 %v177
    %v411 = vunpack.c.l.b16 %v178
    %v412 = vunpack.c.h.b16 %v178
    %v413 = vunpack.c.l.b16 %v179
    %v414 = vunpack.c.h.b16 %v179
    %v415 = vunpack.c.l.b16 %v180
    %v416 = vunpack.c.h.b16 %v180
    %v417 = vunpack.c.l.b16 %v181
    %v418 = vunpack.c.h.b16 %v181
    %v419 = vunpack.c.l.b16 %v182
    %v420 = vunpack.c.h.b16 %v182
    %v421 = vunpack.c.l.b16 %v183
    %v422 = vunpack.c.h.b16 %v183
    %v423 = vunpack.c.l.b16 %v184
    %v424 = vunpack.c.h.b16 %v184
    %v425 = vunpack.c.l.b16 %v185
    %v426 = vunpack.c.h.b16 %v185
    %v427 = vunpack.c.l.b16 %v186
    %v428 = vunpack.c.h.b16 %v186
    %v429 = vunpack.c.l.b16 %v187
    %v430 = vunpack.c.h.b16 %v187
    %v431 = vunpack.c.l.b16 %v188
    %v432 = vunpack.c.h.b16 %v188
    %v433 = vunpack.c.l.b16 %v189
    %v434 = vunpack.c.h.b16 %v189
    %v435 = vunpack.c.l.b16 %v190
    %v436 = vunpack.c.h.b16 %v190
    %v437 = vunpack.c.l.b16 %v191
    %v438 = vunpack.c.h.b16 %v191
    %v439 = vunpack.c.l.b16 %v192
    %v440 = vunpack.c.h.b16 %v192
    %v441 = vunpack.c.l.b16 %v193
    %v442 = vunpack.c.h.b16 %v193
    %v443 = vunpack.c.l.b16 %v194
    %v444 = vunpack.c.h.b16 %v194
    %v445 = vunpack.c.l.b16 %v195
    %v446 = vunpack.c.h.b16 %v195
    %v447 = vunpack.c.l.b16 %v196
    %v448 = vunpack.c.h.b16 %v196
    %v449 = vunpack.c.l.b16 %v197
    %v450 = vunpack.c.h.b16 %v197
    %v451 = vunpack.c.l.b16 %v198
    %v452 = vunpack.c.h.b16 %v198
    %v453 = vunpack.c.l.b16 %v199
    %v454 = vunpack.c.h.b16 %v199
    %v455 = vunpack.c.l.b16 %v200
    %v456 = vunpack.c.h.b16 %v200
    %v457 = vunpack.c.l.b16 %v201
    %v458 = vunpack.c.h.b16 %v201
    %v459 = vunpack.c.l.b16 %v202
    %v460 = vunpack.c.h.b16 %v202
    %v461 = vunpack.c.l.b16 %v203
    %v462 = vunpack.c.h.b16 %v203
    %v463 = vunpack.c.l.b16 %v204
    %v464 = vunpack.c.h.b16 %v204
    %v465 = vunpack.c.l.b16 %v205
    %v466 = vunpack.c.h.b16 %v205
    %v467 = vunpack.c.l.b16 %v206
    %v468 = vunpack.c.h.b16 %v206
    %v469 = vunpack.c.l.b16 %v207
    %v470 = vunpack.c.h.b16 %v207
    %v471 = vunpack.c.l.b16 %v208
    %v472 = vunpack.c.h.b16 %v208
    %v473 = vunpack.c.l.b16 %v209
    %v474 = vunpack.c.h.b16 %v209
    %v475 = vunpack.c.l.b16 %v210
    %v476 = vunpack.c.h.b16 %v210
    %v477 = vunpack.c.l.b16 %v211
    %v478 = vunpack.c.h.b16 %v211
    %v479 = vunpack.c.l.b16 %v212
    %v480 = vunpack.c.h.b16 %v212
    %v481 = vunpack.c.l.b16 %v213
    %v482 = vunpack.c.h.b16 %v213
    %v483 = vunpack.c.l.b16 %v214
    %v484 = vunpack.c.h.b16 %v214
    %v485 = vunpack.c.l.b16 %v215
    %v486 = vunpack.c.h.b16 %v215
    %v487 = vunpack.c.l.b16 %v216
    %v488 = vunpack.c.h.b16 %v216
    %v489 = vunpack.c.l.b16 %v217
    %v490 = vunpack.c.h.b16 %v217
    %v491 = vunpack.c.l.b16 %v218
    %v492 = vunpack.c.h.b16 %v218
    %v493 = vunpack.c.l.b16 %v219
    %v494 = vunpack.c.h.b16 %v219
    %v495 = vunpack.c.l.b16 %v220
    %v496 = vunpack.c.h.b16 %v220
    %v497 = vunpack.c.l.b16 %v221
    %v498 = vunpack.c.h.b16 %v221
    %v499 = vunpack.c.l.b16 %v222
    %v500 = vunpack.c.h.b16 %v222
    %v501 = vunpack.c.l.b16 %v223
    %v502 = vunpack.c.h.b16 %v223
    %v503 = vunpack.c.l.b16 %v224
    %v504 = vunpack.c.h.b16 %v224
    %v505 = vunpack.c.l.b16 %v225
    %v506 = vunpack.c.h.b16 %v225
    %v507 = vunpack.c.l.b16 %v226
    %v508 = vunpack.c.h.b16 %v226
    %v509 = vunpack.c.l.b16 %v227
    %v510 = vunpack.c.h.b16 %v227
    %v511 = vunpack.c.l.b16 %v228
    %v512 = vunpack.c.h.b16 %v228
    %v513 = vunpack.c.l.b16 %v229
    %v514 = vunpack.c.h.b16 %v229
    %v515 = vunpack.c.l.b16 %v230
    %v516 = vunpack.c.h.b16 %v230
    %v517 = vunpack.c.l.b16 %v231
    %v518 = vunpack.c.h.b16 %v231
    %v519 = vunpack.c.l.b16 %v232
    %v520 = vunpack.c.h.b16 %v232
    %v521 = vunpack.c.l.b16 %v233
    %v522 = vunpack.c.h.b16 %v233
    %v523 = vunpack.c.l.b16 %v234
    %v524 = vunpack.c.h.b16 %v234
    %v525 = vunpack.c.l.b16 %v235
    %v526 = vunpack.c.h.b16 %v235
    %v527 = vunpack.c.l.b16 %v236
    %v528 = vunpack.c.h.b16 %v236
    %v529 = vunpack.c.l.b16 %v237
    %v530 = vunpack.c.h.b16 %v237
    %v531 = vunpack.c.l.b16 %v238
    %v532 = vunpack.c.h.b16 %v238
    %v533 = vunpack.c.l.b16 %v239
    %v534 = vunpack.c.h.b16 %v239
    %v535 = vunpack.c.l.b16 %v240
    %v536 = vunpack.c.h.b16 %v240
    %v537 = vunpack.c.l.b16 %v241
    %v538 = vunpack.c.h.b16 %v241
    %v539 = vunpack.c.l.b16 %v242
    %v540 = vunpack.c.h.b16 %v242
    %v541 = vunpack.c.l.b16 %v243
    %v542 = vunpack.c.h.b16 %v243
    %v543 = vunpack.c.l.b16 %v244
    %v544 = vunpack.c.h.b16 %v244
    %v545 = vpack.c.b16 %v351, %v349
    %v546 = vpack.c.b16 %v352, %v350
    %v547 = vpack.c.b16 %v355, %v353
    %v548 = vpack.c.b16 %v356, %v354
    %v549 = vpack.c.b16 %v359, %v357
    %v550 = vpack.c.b16 %v360, %v358
    %v551 = vpack.c.b16 %v363, %v361
    %v552 = vpack.c.b16 %v364, %v362
    %v553 = vpack.c.b16 %v367, %v365
    %v554 = vpack.c.b16 %v368, %v366
    %v555 = vpack.c.b16 %v371, %v369
    %v556 = vpack.c.b16 %v372, %v370
    %v557 = vpack.c.b16 %v375, %v373
    %v558 = vpack.c.b16 %v376, %v374
    %v559 = vpack.c.b16 %v379, %v377
    %v560 = vpack.c.b16 %v380, %v378
    %v561 = vpack.c.b16 %v383, %v381
    %v562 = vpack.c.b16 %v384, %v382
    %v563 = vpack.c.b16 %v387, %v385
    %v564 = vpack.c.b16 %v388, %v386
    %v565 = vpack.c.b16 %v391, %v389
    %v566 = vpack.c.b16 %v392, %v390
    %v567 = vpack.c.b16 %v395, %v393
    %v568 = vpack.c.b16 %v396, %v394
    %v569 = vpack.c.b16 %v399, %v397
    %v570 = vpack.c.b16 %v400, %v398
    %v571 = vpack.c.b16 %v403, %v401
    %v572 = vpack.c.b16 %v404, %v402
    %v573 = vpack.c.b16 %v407, %v405
    %v574 = vpack.c.b16 %v408, %v406
    %v575 = vpack.c.b16 %v411, %v409
    %v576 = vpack.c.b16 %v412, %v410
    %v577 = vpack.c.b16 %v415, %v413
    %v578 = vpack.c.b16 %v416, %v414
    %v579 = vpack.c.b16 %v419, %v417
    %v580 = vpack.c.b16 %v420, %v418
    %v581 = vpack.c.b16 %v423, %v421
    %v582 = vpack.c.b16 %v424, %v422
    %v583 = vpack.c.b16 %v427, %v425
    %v584 = vpack.c.b16 %v428, %v426
    %v585 = vpack.c.b16 %v431, %v429
    %v586 = vpack.c.b16 %v432, %v430
    %v587 = vpack.c.b16 %v435, %v433
    %v588 = vpack.c.b16 %v436, %v434
    %v589 = vpack.c.b16 %v439, %v437
    %v590 = vpack.c.b16 %v440, %v438
    %v591 = vpack.c.b16 %v443, %v441
    %v592 = vpack.c.b16 %v444, %v442
    %v593 = vpack.c.b16 %v447, %v445
    %v594 = vpack.c.b16 %v448, %v446
    %v595 = vpack.c.b16 %v451, %v449
    %v596 = vpack.c.b16 %v452, %v450
    %v597 = vpack.c.b16 %v455, %v453
    %v598 = vpack.c.b16 %v456, %v454
    %v599 = vpack.c.b16 %v459, %v457
    %v600 = vpack.c.b16 %v460, %v458
    %v601 = vpack.c.b16 %v463, %v461
    %v602 = vpack.c.b16 %v464, %v462
    %v603 = vpack.c.b16 %v467, %v465
    %v604 = vpack.c.b16 %v468, %v466
    %v605 = vpack.c.b16 %v471, %v469
    %v606 = vpack.c.b16 %v472, %v470
    %v607 = vpack.c.b16 %v475, %v473
    %v608 = vpack.c.b16 %v476, %v474
    %v609 = vpack.c.b16 %v479, %v477
    %v610 = vpack.c.b16 %v480, %v478
    %v611 = vpack.c.b16 %v483, %v481
    %v612 = vpack.c.b16 %v484, %v482
    %v613 = vpack.c.b16 %v487, %v485
    %v614 = vpack.c.b16 %v488, %v486
    %v615 = vpack.c.b16 %v491, %v489
    %v616 = vpack.c.b16 %v492, %v490
    %v617 = vpack.c.b16 %v495, %v493
    %v618 = vpack.c.b16 %v496, %v494
    %v619 = vpack.c.b16 %v499, %v497
    %v620 = vpack.c.b16 %v500, %v498
    %v621 = vpack.c.b16 %v503, %v501
    %v622 = vpack.c.b16 %v504, %v502
    %v623 = vpack.c.b16 %v507, %v505
    %v624 = vpack.c.b16 %v508, %v506
    %v625 = vpack.c.b16 %v511, %v509
    %v626 = vpack.c.b16 %v512, %v510
    %v627 = vpack.c.b16 %v515, %v513
    %v628 = vpack.c.b16 %v516, %v514
    %v629 = vpack.c.b16 %v519, %v517
    %v630 = vpack.c.b16 %v520, %v518
    %v631 = vpack.c.b16 %v523, %v521
    %v632 = vpack.c.b16 %v524, %v522
    %v633 = vpack.c.b16 %v527, %v525
    %v634 = vpack.c.b16 %v528, %v526
    %v635 = vpack.c.b16 %v531, %v529
    %v636 = vpack.c.b16 %v532, %v530
    %v637 = vpack.c.b16 %v535, %v533
    %v638 = vpack.c.b16 %v536, %v534
    %v639 = vpack.c.b16 %v539, %v537
    %v640 = vpack.c.b16 %v540, %v538
    %v641 = vpack.c.b16 %v543, %v541
    %v642 = vpack.c.b16 %v544, %v542
    %vm741 = vcmask 130048
    %v743 = vsel %vm741, %v146, 0
    %745 = vmatpush.bf16.msra.mxu0 %v559
    %746 = vmatpush.bf16.msra.mxu0 %v557
    %747 = vmatpush.bf16.msra.mxu0 %v555
    %748 = vmatpush.bf16.msra.mxu0 %v553
    %749 = vmatpush.bf16.msra.mxu0 %v551
    %750 = vmatpush.bf16.msra.mxu0 %v549
    %751 = vmatpush.bf16.msra.mxu0 %v547
    %752 = vmatpush.bf16.msra.mxu0 %v545
    %753 = vmatmul.bf16.gmra.mxu0 %v140
    %v754 = vpop.f32.mrf.mxu0
    %v755 = vadd.f32 %v247, %v754
    %v756 = vpop.f32.mrf.mxu0
    %v757 = vadd.f32 %v247, %v756
    %758 = vdwg.mxu0
    %759 = vmatpush.bf16.msra.mxu0 %v575
    %760 = vmatpush.bf16.msra.mxu0 %v573
    %761 = vmatpush.bf16.msra.mxu0 %v571
    %762 = vmatpush.bf16.msra.mxu0 %v569
    %763 = vmatpush.bf16.msra.mxu0 %v567
    %764 = vmatpush.bf16.msra.mxu0 %v565
    %765 = vmatpush.bf16.msra.mxu0 %v563
    %766 = vmatpush.bf16.msra.mxu0 %v561
    %767 = vmatmul.bf16.gmra.mxu0 %v141
    %v768 = vpop.f32.mrf.mxu0
    %v769 = vadd.f32 %v755, %v768
    %v770 = vpop.f32.mrf.mxu0
    %v771 = vadd.f32 %v757, %v770
    %772 = vdwg.mxu0
    %773 = vmatpush.bf16.msra.mxu0 %v591
    %774 = vmatpush.bf16.msra.mxu0 %v589
    %775 = vmatpush.bf16.msra.mxu0 %v587
    %776 = vmatpush.bf16.msra.mxu0 %v585
    %777 = vmatpush.bf16.msra.mxu0 %v583
    %778 = vmatpush.bf16.msra.mxu0 %v581
    %779 = vmatpush.bf16.msra.mxu0 %v579
    %780 = vmatpush.bf16.msra.mxu0 %v577
    %781 = vmatmul.bf16.gmra.mxu0 %v142
    %v782 = vpop.f32.mrf.mxu0
    %v783 = vadd.f32 %v769, %v782
    %v784 = vpop.f32.mrf.mxu0
    %v785 = vadd.f32 %v771, %v784
    %786 = vdwg.mxu0
    %787 = vmatpush.bf16.msra.mxu0 %v607
    %788 = vmatpush.bf16.msra.mxu0 %v605
    %789 = vmatpush.bf16.msra.mxu0 %v603
    %790 = vmatpush.bf16.msra.mxu0 %v601
    %791 = vmatpush.bf16.msra.mxu0 %v599
    %792 = vmatpush.bf16.msra.mxu0 %v597
    %793 = vmatpush.bf16.msra.mxu0 %v595
    %794 = vmatpush.bf16.msra.mxu0 %v593
    %795 = vmatmul.bf16.gmra.mxu0 %v143
    %v796 = vpop.f32.mrf.mxu0
    %v797 = vadd.f32 %v783, %v796
    %v798 = vpop.f32.mrf.mxu0
    %v799 = vadd.f32 %v785, %v798
    %800 = vdwg.mxu0
    %801 = vmatpush.bf16.msra.mxu0 %v623
    %802 = vmatpush.bf16.msra.mxu0 %v621
    %803 = vmatpush.bf16.msra.mxu0 %v619
    %804 = vmatpush.bf16.msra.mxu0 %v617
    %805 = vmatpush.bf16.msra.mxu0 %v615
    %806 = vmatpush.bf16.msra.mxu0 %v613
    %807 = vmatpush.bf16.msra.mxu0 %v611
    %808 = vmatpush.bf16.msra.mxu0 %v609
    %809 = vmatmul.bf16.gmra.mxu0 %v144
    %v810 = vpop.f32.mrf.mxu0
    %v811 = vadd.f32 %v797, %v810
    %v812 = vpop.f32.mrf.mxu0
    %v813 = vadd.f32 %v799, %v812
    %814 = vdwg.mxu0
    %815 = vmatpush.bf16.msra.mxu0 %v639
    %816 = vmatpush.bf16.msra.mxu0 %v637
    %817 = vmatpush.bf16.msra.mxu0 %v635
    %818 = vmatpush.bf16.msra.mxu0 %v633
    %819 = vmatpush.bf16.msra.mxu0 %v631
    %820 = vmatpush.bf16.msra.mxu0 %v629
    %821 = vmatpush.bf16.msra.mxu0 %v627
    %822 = vmatpush.bf16.msra.mxu0 %v625
    %823 = vmatmul.bf16.gmra.mxu0 %v145
    %v824 = vpop.f32.mrf.mxu0
    %v825 = vadd.f32 %v811, %v824
    %v826 = vpop.f32.mrf.mxu0
    %v827 = vadd.f32 %v813, %v826
    %828 = vdwg.mxu0
    %829 = vmatpush.bf16.msra.mxu0 0
    %830 = vmatpush.bf16.msra.mxu0 0
    %831 = vmatpush.bf16.msra.mxu0 0
    %832 = vmatpush.bf16.msra.mxu0 0
    %833 = vmatpush.bf16.msra.mxu0 0
    %834 = vmatpush.bf16.msra.mxu0 0
    %835 = vmatpush.bf16.msra.mxu0 0
    %836 = vmatpush.bf16.msra.mxu0 %v641
    %837 = vmatmul.bf16.gmra.mxu0 %v743
    %v838 = vpop.f32.mrf.mxu0
    %v839 = vadd.f32 %v825, %v838
    %v840 = vpop.f32.mrf.mxu0
    %v841 = vadd.f32 %v827, %v840
    %842 = vdwg.mxu0
    %843 = vmatpush.bf16.msra.mxu0 %v560
    %844 = vmatpush.bf16.msra.mxu0 %v558
    %845 = vmatpush.bf16.msra.mxu0 %v556
    %846 = vmatpush.bf16.msra.mxu0 %v554
    %847 = vmatpush.bf16.msra.mxu0 %v552
    %848 = vmatpush.bf16.msra.mxu0 %v550
    %849 = vmatpush.bf16.msra.mxu0 %v548
    %850 = vmatpush.bf16.msra.mxu0 %v546
    %851 = vmatmul.bf16.gmra.mxu0 %v140
    %v852 = vpop.f32.mrf.mxu0
    %v853 = vadd.f32 %v248, %v852
    %v854 = vpop.f32.mrf.mxu0
    %v855 = vadd.f32 %v248, %v854
    %856 = vdwg.mxu0
    %857 = vmatpush.bf16.msra.mxu0 %v576
    %858 = vmatpush.bf16.msra.mxu0 %v574
    %859 = vmatpush.bf16.msra.mxu0 %v572
    %860 = vmatpush.bf16.msra.mxu0 %v570
    %861 = vmatpush.bf16.msra.mxu0 %v568
    %862 = vmatpush.bf16.msra.mxu0 %v566
    %863 = vmatpush.bf16.msra.mxu0 %v564
    %864 = vmatpush.bf16.msra.mxu0 %v562
    %865 = vmatmul.bf16.gmra.mxu0 %v141
    %v866 = vpop.f32.mrf.mxu0
    %v867 = vadd.f32 %v853, %v866
    %v868 = vpop.f32.mrf.mxu0
    %v869 = vadd.f32 %v855, %v868
    %870 = vdwg.mxu0
    %871 = vmatpush.bf16.msra.mxu0 %v592
    %872 = vmatpush.bf16.msra.mxu0 %v590
    %873 = vmatpush.bf16.msra.mxu0 %v588
    %874 = vmatpush.bf16.msra.mxu0 %v586
    %875 = vmatpush.bf16.msra.mxu0 %v584
    %876 = vmatpush.bf16.msra.mxu0 %v582
    %877 = vmatpush.bf16.msra.mxu0 %v580
    %878 = vmatpush.bf16.msra.mxu0 %v578
    %879 = vmatmul.bf16.gmra.mxu0 %v142
    %v880 = vpop.f32.mrf.mxu0
    %v881 = vadd.f32 %v867, %v880
    %v882 = vpop.f32.mrf.mxu0
    %v883 = vadd.f32 %v869, %v882
    %884 = vdwg.mxu0
    %885 = vmatpush.bf16.msra.mxu0 %v608
    %886 = vmatpush.bf16.msra.mxu0 %v606
    %887 = vmatpush.bf16.msra.mxu0 %v604
    %888 = vmatpush.bf16.msra.mxu0 %v602
    %889 = vmatpush.bf16.msra.mxu0 %v600
    %890 = vmatpush.bf16.msra.mxu0 %v598
    %891 = vmatpush.bf16.msra.mxu0 %v596
    %892 = vmatpush.bf16.msra.mxu0 %v594
    %893 = vmatmul.bf16.gmra.mxu0 %v143
    %v894 = vpop.f32.mrf.mxu0
    %v895 = vadd.f32 %v881, %v894
    %v896 = vpop.f32.mrf.mxu0
    %v897 = vadd.f32 %v883, %v896
    %898 = vdwg.mxu0
    %899 = vmatpush.bf16.msra.mxu0 %v624
    %900 = vmatpush.bf16.msra.mxu0 %v622
    %901 = vmatpush.bf16.msra.mxu0 %v620
    %902 = vmatpush.bf16.msra.mxu0 %v618
    %903 = vmatpush.bf16.msra.mxu0 %v616
    %904 = vmatpush.bf16.msra.mxu0 %v614
    %905 = vmatpush.bf16.msra.mxu0 %v612
    %906 = vmatpush.bf16.msra.mxu0 %v610
    %907 = vmatmul.bf16.gmra.mxu0 %v144
    %v908 = vpop.f32.mrf.mxu0
    %v909 = vadd.f32 %v895, %v908
    %v910 = vpop.f32.mrf.mxu0
    %v911 = vadd.f32 %v897, %v910
    %912 = vdwg.mxu0
    %913 = vmatpush.bf16.msra.mxu0 %v640
    %914 = vmatpush.bf16.msra.mxu0 %v638
    %915 = vmatpush.bf16.msra.mxu0 %v636
    %916 = vmatpush.bf16.msra.mxu0 %v634
    %917 = vmatpush.bf16.msra.mxu0 %v632
    %918 = vmatpush.bf16.msra.mxu0 %v630
    %919 = vmatpush.bf16.msra.mxu0 %v628
    %920 = vmatpush.bf16.msra.mxu0 %v626
    %921 = vmatmul.bf16.gmra.mxu0 %v145
    %v922 = vpop.f32.mrf.mxu0
    %v923 = vadd.f32 %v909, %v922
    %v924 = vpop.f32.mrf.mxu0
    %v925 = vadd.f32 %v911, %v924
    %926 = vdwg.mxu0
    %927 = vmatpush.bf16.msra.mxu0 0
    %928 = vmatpush.bf16.msra.mxu0 0
    %929 = vmatpush.bf16.msra.mxu0 0
    %930 = vmatpush.bf16.msra.mxu0 0
    %931 = vmatpush.bf16.msra.mxu0 0
    %932 = vmatpush.bf16.msra.mxu0 0
    %933 = vmatpush.bf16.msra.mxu0 0
    %934 = vmatpush.bf16.msra.mxu0 %v642
    %935 = vmatmul.bf16.gmra.mxu0 %v743
    %v936 = vpop.f32.mrf.mxu0
    %v937 = vadd.f32 %v923, %v936
    %v938 = vpop.f32.mrf.mxu0
    %v939 = vadd.f32 %v925, %v938
    %940 = vdwg.mxu0
    %v941 = vmax.f32 %v839, 0.0
    %v942 = vmax.f32 %v937, 0.0
    %v943 = vmax.f32 %v841, 0.0
    %v944 = vmax.f32 %v939, 0.0
    %v945 = vpack.c.bf16 %v943, %v941
    %v946 = vpack.c.bf16 %v944, %v942
    %v947 = vld [vmem:[#allocation8] sm:$0xf]
    %v948 = vld [vmem:[#allocation8 + $0x4] sm:$0xf]
    %v949 = vld [vmem:[#allocation8 + $0x8] sm:$0xf]
    %v950 = vld [vmem:[#allocation8 + $0xc] sm:$0xf]
    %v951 = vld [vmem:[#allocation8 + $0x10] sm:$0xf]
    %v952 = vld [vmem:[#allocation8 + $0x14] sm:$0xf]
    %v953 = vld [vmem:[#allocation8 + $0x18] sm:$0xf]
    %v954 = vld [vmem:[#allocation8 + $0x1c] sm:$0xf]
    %v955 = vld [vmem:[#allocation8 + $0x20] sm:$0xf]
    %v956 = vld [vmem:[#allocation8 + $0x24] sm:$0xf]
    %v957 = vld [vmem:[#allocation8 + $0x28] sm:$0xf]
    %v958 = vld [vmem:[#allocation8 + $0x2c] sm:$0xf]
    %v959 = vld [vmem:[#allocation8 + $0x30] sm:$0xf]
    %v960 = vld [vmem:[#allocation8 + $0x34] sm:$0xf]
    %v961 = vld [vmem:[#allocation8 + $0x38] sm:$0xf]
    %v962 = vld [vmem:[#allocation8 + $0x3c] sm:$0xf]
    %v963 = vld [vmem:[#allocation8 + $0x40] sm:$0xf]
    %v964 = vld [vmem:[#allocation8 + $0x44] sm:$0xf]
    %v965 = vld [vmem:[#allocation8 + $0x48] sm:$0xf]
    %v966 = vld [vmem:[#allocation8 + $0x4c] sm:$0xf]
    %v967 = vld [vmem:[#allocation8 + $0x50] sm:$0xf]
    %v968 = vld [vmem:[#allocation8 + $0x54] sm:$0xf]
    %v969 = vld [vmem:[#allocation8 + $0x58] sm:$0xf]
    %v970 = vld [vmem:[#allocation8 + $0x5c] sm:$0xf]
    %v971 = vld [vmem:[#allocation8 + $0x60] sm:$0xf]
    %v972 = vld [vmem:[#allocation8 + $0x64] sm:$0xf]
    %v973 = vld [vmem:[#allocation8 + $0x68] sm:$0xf]
    %v974 = vld [vmem:[#allocation8 + $0x6c] sm:$0xf]
    %v975 = vld [vmem:[#allocation8 + $0x70] sm:$0xf]
    %v976 = vld [vmem:[#allocation8 + $0x74] sm:$0xf]
    %v977 = vld [vmem:[#allocation8 + $0x78] sm:$0xf]
    %v978 = vld [vmem:[#allocation8 + $0x7c] sm:$0xf]
    %v979 = vld [vmem:[%s4] sm:$0x1]
    %v981 = vperm.slane %v979, 0
    %v1015 = vunpack.c.l.b16 %v947
    %v1016 = vunpack.c.l.b16 %v948
    %v1017 = vunpack.c.l.b16 %v949
    %v1018 = vunpack.c.l.b16 %v950
    %v1019 = vunpack.c.l.b16 %v951
    %v1020 = vunpack.c.l.b16 %v952
    %v1021 = vunpack.c.l.b16 %v953
    %v1022 = vunpack.c.l.b16 %v954
    %v1023 = vunpack.c.l.b16 %v955
    %v1024 = vunpack.c.l.b16 %v956
    %v1025 = vunpack.c.l.b16 %v957
    %v1026 = vunpack.c.l.b16 %v958
    %v1027 = vunpack.c.l.b16 %v959
    %v1028 = vunpack.c.l.b16 %v960
    %v1029 = vunpack.c.l.b16 %v961
    %v1030 = vunpack.c.l.b16 %v962
    %v1031 = vunpack.c.l.b16 %v963
    %v1032 = vunpack.c.l.b16 %v964
    %v1033 = vunpack.c.l.b16 %v965
    %v1034 = vunpack.c.l.b16 %v966
    %v1035 = vunpack.c.l.b16 %v967
    %v1036 = vunpack.c.l.b16 %v968
    %v1037 = vunpack.c.l.b16 %v969
    %v1038 = vunpack.c.l.b16 %v970
    %v1039 = vunpack.c.l.b16 %v971
    %v1040 = vunpack.c.l.b16 %v972
    %v1041 = vunpack.c.l.b16 %v973
    %v1042 = vunpack.c.l.b16 %v974
    %v1043 = vunpack.c.l.b16 %v975
    %v1044 = vunpack.c.l.b16 %v976
    %v1045 = vunpack.c.l.b16 %v977
    %v1046 = vunpack.c.l.b16 %v978
    %v1047 = vpack.c.b16 %v1016, %v1015
    %v1048 = vpack.c.b16 %v1018, %v1017
    %v1049 = vpack.c.b16 %v1020, %v1019
    %v1050 = vpack.c.b16 %v1022, %v1021
    %v1051 = vpack.c.b16 %v1024, %v1023
    %v1052 = vpack.c.b16 %v1026, %v1025
    %v1053 = vpack.c.b16 %v1028, %v1027
    %v1054 = vpack.c.b16 %v1030, %v1029
    %v1055 = vpack.c.b16 %v1032, %v1031
    %v1056 = vpack.c.b16 %v1034, %v1033
    %v1057 = vpack.c.b16 %v1036, %v1035
    %v1058 = vpack.c.b16 %v1038, %v1037
    %v1059 = vpack.c.b16 %v1040, %v1039
    %v1060 = vpack.c.b16 %v1042, %v1041
    %v1061 = vpack.c.b16 %v1044, %v1043
    %v1062 = vpack.c.b16 %v1046, %v1045
    %1079 = vmatpush.bf16.msra.mxu0 %v1054
    %1080 = vmatpush.bf16.msra.mxu0 %v1053
    %1081 = vmatpush.bf16.msra.mxu0 %v1052
    %1082 = vmatpush.bf16.msra.mxu0 %v1051
    %1083 = vmatpush.bf16.msra.mxu0 %v1050
    %1084 = vmatpush.bf16.msra.mxu0 %v1049
    %1085 = vmatpush.bf16.msra.mxu0 %v1048
    %1086 = vmatpush.bf16.msra.mxu0 %v1047
    %1087 = vmatmul.bf16.gmra.mxu0 %v945
    %v1088 = vpop.f32.mrf.mxu0
    %v1089 = vadd.f32 %v981, %v1088
    %v1090 = vpop.f32.mrf.mxu0
    %v1091 = vadd.f32 %v981, %v1090
    %1092 = vdwg.mxu0
    %1093 = vmatpush.bf16.msra.mxu0 %v1062
    %1094 = vmatpush.bf16.msra.mxu0 %v1061
    %1095 = vmatpush.bf16.msra.mxu0 %v1060
    %1096 = vmatpush.bf16.msra.mxu0 %v1059
    %1097 = vmatpush.bf16.msra.mxu0 %v1058
    %1098 = vmatpush.bf16.msra.mxu0 %v1057
    %1099 = vmatpush.bf16.msra.mxu0 %v1056
    %1100 = vmatpush.bf16.msra.mxu0 %v1055
    %1101 = vmatmul.bf16.gmra.mxu0 %v946
    %v1102 = vpop.f32.mrf.mxu0
    %v1103 = vadd.f32 %v1089, %v1102
    %v1104 = vpop.f32.mrf.mxu0
    %v1105 = vadd.f32 %v1091, %v1104
    %1106 = vdwg.mxu0
    %v1107 = vmax.f32 %v1103, 0.0
    %v1108 = vmax.f32 %v1105, 0.0
    %v1109 = vpack.c.bf16 %v1108, %v1107
    %v1110 = vld [vmem:[#allocation10] sm:$0xf]
    %v1111 = vld [vmem:[#allocation10 + $0x4] sm:$0xf]
    %v1112 = vld [vmem:[#allocation10 + $0x8] sm:$0xf]
    %v1113 = vld [vmem:[#allocation10 + $0xc] sm:$0xf]
    %v1114 = vld [vmem:[#allocation10 + $0x10] sm:$0xf]
    %v1115 = vld [vmem:[#allocation10 + $0x14] sm:$0xf]
    %v1116 = vld [vmem:[#allocation10 + $0x18] sm:$0xf]
    %v1117 = vld [vmem:[#allocation10 + $0x1c] sm:$0xf]
    %v1118 = vld [vmem:[#allocation10 + $0x20] sm:$0xf]
    %v1119 = vld [vmem:[#allocation10 + $0x24] sm:$0xf]
    %v1120 = vld [vmem:[#allocation10 + $0x28] sm:$0xf]
    %v1121 = vld [vmem:[#allocation10 + $0x2c] sm:$0xf]
    %v1122 = vld [vmem:[#allocation10 + $0x30] sm:$0xf]
    %v1123 = vld [vmem:[#allocation10 + $0x34] sm:$0xf]
    %v1124 = vld [vmem:[#allocation10 + $0x38] sm:$0xf]
    %v1125 = vld [vmem:[#allocation10 + $0x3c] sm:$0xf]
    %v1126 = vld [vmem:[%s6] sm:$0x1]
    %v1128 = vperm.slane %v1126, 0
    %v1146 = vunpack.c.l.b16 %v1110
    %v1147 = vunpack.c.l.b16 %v1111
    %v1148 = vunpack.c.l.b16 %v1112
    %v1149 = vunpack.c.l.b16 %v1113
    %v1150 = vunpack.c.l.b16 %v1114
    %v1151 = vunpack.c.l.b16 %v1115
    %v1152 = vunpack.c.l.b16 %v1116
    %v1153 = vunpack.c.l.b16 %v1117
    %v1154 = vunpack.c.l.b16 %v1118
    %v1155 = vunpack.c.l.b16 %v1119
    %v1156 = vunpack.c.l.b16 %v1120
    %v1157 = vunpack.c.l.b16 %v1121
    %v1158 = vunpack.c.l.b16 %v1122
    %v1159 = vunpack.c.l.b16 %v1123
    %v1160 = vunpack.c.l.b16 %v1124
    %v1161 = vunpack.c.l.b16 %v1125
    %v1162 = vpack.c.b16 %v1147, %v1146
    %v1163 = vpack.c.b16 %v1149, %v1148
    %v1164 = vpack.c.b16 %v1151, %v1150
    %v1165 = vpack.c.b16 %v1153, %v1152
    %v1166 = vpack.c.b16 %v1155, %v1154
    %v1167 = vpack.c.b16 %v1157, %v1156
    %v1168 = vpack.c.b16 %v1159, %v1158
    %v1169 = vpack.c.b16 %v1161, %v1160
    %1178 = vmatpush.bf16.msra.mxu0 %v1169
    %1179 = vmatpush.bf16.msra.mxu0 %v1168
    %1180 = vmatpush.bf16.msra.mxu0 %v1167
    %1181 = vmatpush.bf16.msra.mxu0 %v1166
    %1182 = vmatpush.bf16.msra.mxu0 %v1165
    %1183 = vmatpush.bf16.msra.mxu0 %v1164
    %1184 = vmatpush.bf16.msra.mxu0 %v1163
    %1185 = vmatpush.bf16.msra.mxu0 %v1162
    %1186 = vmatmul.bf16.gmra.mxu0 %v1109
    %v1187 = vpop.f32.mrf.mxu0
    %v1188 = vadd.f32 %v1128, %v1187
    %v1189 = vpop.f32.mrf.mxu0
    %v1190 = vadd.f32 %v1128, %v1189
    %1191 = vdwg.mxu0
    %v1192 = vmax.f32 %v1188, 0.0
    %v1193 = vmax.f32 %v1190, 0.0
    %v1194 = vpack.c.bf16 %v1193, %v1192
    %v1195 = vld [vmem:[#allocation11] sm:$0xf]
    %v1196 = vld [vmem:[#allocation11 + $0x4] sm:$0xf]
    %v1197 = vld [vmem:[#allocation11 + $0x8] sm:$0xf]
    %v1198 = vld [vmem:[#allocation11 + $0xc] sm:$0xf]
    %v1199 = vld [vmem:[#allocation11 + $0x10] sm:$0xf]
    %v1200 = vld [vmem:[#allocation11 + $0x14] sm:$0xf]
    %v1201 = vld [vmem:[#allocation11 + $0x18] sm:$0xf]
    %v1202 = vld [vmem:[#allocation11 + $0x1c] sm:$0xf]
    %v1203 = vld [vmem:[#allocation11 + $0x20] sm:$0xf]
    %v1204 = vld [vmem:[#allocation11 + $0x24] sm:$0xf]
    %v1205 = vld [vmem:[#allocation11 + $0x28] sm:$0xf]
    %v1206 = vld [vmem:[#allocation11 + $0x2c] sm:$0xf]
    %v1207 = vld [vmem:[#allocation11 + $0x30] sm:$0xf]
    %v1208 = vld [vmem:[#allocation11 + $0x34] sm:$0xf]
    %v1209 = vld [vmem:[#allocation11 + $0x38] sm:$0xf]
    %v1210 = vld [vmem:[#allocation11 + $0x3c] sm:$0xf]
    %v1211 = vld [vmem:[%s8] sm:$0x1]
    %v1213 = vperm.slane %v1211, 0
    %v1231 = vunpack.c.l.b16 %v1195
    %v1232 = vunpack.c.l.b16 %v1196
    %v1233 = vunpack.c.l.b16 %v1197
    %v1234 = vunpack.c.l.b16 %v1198
    %v1235 = vunpack.c.l.b16 %v1199
    %v1236 = vunpack.c.l.b16 %v1200
    %v1237 = vunpack.c.l.b16 %v1201
    %v1238 = vunpack.c.l.b16 %v1202
    %v1239 = vunpack.c.l.b16 %v1203
    %v1240 = vunpack.c.l.b16 %v1204
    %v1241 = vunpack.c.l.b16 %v1205
    %v1242 = vunpack.c.l.b16 %v1206
    %v1243 = vunpack.c.l.b16 %v1207
    %v1244 = vunpack.c.l.b16 %v1208
    %v1245 = vunpack.c.l.b16 %v1209
    %v1246 = vunpack.c.l.b16 %v1210
    %v1247 = vpack.c.b16 %v1232, %v1231
    %v1248 = vpack.c.b16 %v1234, %v1233
    %v1249 = vpack.c.b16 %v1236, %v1235
    %v1250 = vpack.c.b16 %v1238, %v1237
    %v1251 = vpack.c.b16 %v1240, %v1239
    %v1252 = vpack.c.b16 %v1242, %v1241
    %v1253 = vpack.c.b16 %v1244, %v1243
    %v1254 = vpack.c.b16 %v1246, %v1245
    %1263 = vmatpush.bf16.msra.mxu0 %v1254
    %1264 = vmatpush.bf16.msra.mxu0 %v1253
    %1265 = vmatpush.bf16.msra.mxu0 %v1252
    %1266 = vmatpush.bf16.msra.mxu0 %v1251
    %1267 = vmatpush.bf16.msra.mxu0 %v1250
    %1268 = vmatpush.bf16.msra.mxu0 %v1249
    %1269 = vmatpush.bf16.msra.mxu0 %v1248
    %1270 = vmatpush.bf16.msra.mxu0 %v1247
    %1271 = vmatmul.bf16.gmra.mxu0 %v1194
    %v1272 = vpop.f32.mrf.mxu0
    %v1273 = vadd.f32 %v1213, %v1272
    %v1274 = vpop.f32.mrf.mxu0
    %v1275 = vadd.f32 %v1213, %v1274
    %1276 = vdwg.mxu0
    %1277 = vmax.xlane.f32.xlu0 %v1273
    %v1278 = vpop.xlane.xlu0 %1277
    %1279 = vmax.xlane.f32.xlu0 %v1275
    %v1280 = vpop.xlane.xlu0 %1279
    %v1281 = vsub.f32 %v1273, %v1278
    %v1282 = vsub.f32 %v1275, %v1280
    %v1283 = vmul.f32 %v1281, 1.442695
    %v1284 = vpow.pop %v1283
    %v1285 = vmul.f32 %v1282, 1.442695
    %v1286 = vpow.pop %v1285
    %1287 = vadd.xlane.f32.xlu0 %v1284
    %v1288 = vpop.xlane.xlu0 %1287
    %1289 = vadd.xlane.f32.xlu0 %v1286
    %v1290 = vpop.xlane.xlu0 %1289
    %v1291 = vlog2.pop %v1288
    %v1292 = vmul.f32 %v1291, 0.6931472
    %v1293 = vlog2.pop %v1290
    %v1294 = vmul.f32 %v1293, 0.6931472
    %v1295 = vsub.f32 %v1281, %v1292
    %v1296 = vsub.f32 %v1282, %v1294
    %1297 = vst [vmem:[#allocation13] sm:$0xff] %v1295
    %1298 = vst [vmem:[#allocation13 + $0x8] sm:$0xff] %v1296
    // Predicated region
    $region62: #{tpu_custom_call.1} parent=1 // pred_check
      _
    $region63: #{tpu_custom_call.1} parent=1 // pred_check_branch
      %1300 = sbr.rel (0) target = $region65
    $region64: #{tpu_custom_call.1} parent=1 // pred_region
      %1302 = vsyncadd [#allocation4], 0
      %s1303 = sshll.u32 [#allocation13], 4
      %s1304 = int_to_ptr.vmem [resolvable:$true] %s1303
      %s1305 = sshll.u32 %s9, 4
      %s1306 = int_to_ptr.hbm [resolvable:$true] %s1305
      %1311 = dma.vmem_to_hbm [thread:$0]  %s1304, 256, %s1306, [#allocation4], 128, 128, 8
    $region65: #{tpu_custom_call.1} parent=1 // pred_fallthru
      _
    // Predicated region
    $region66: #{tpu_custom_call.1} parent=1 // pred_check
      _
    $region67: #{tpu_custom_call.1} parent=1 // pred_check_branch
      %1313 = sbr.rel (0) target = $region69
    $region68: #{tpu_custom_call.1} parent=1 // pred_region
      %1315 = dma.done [#allocation4], 256
    $region69: #{tpu_custom_call.1} parent=1 // pred_fallthru
      _
    %1316 = vsyncpa [#allocation3], 1
    %1317 = vsyncpa [#allocation6], 1
    %1318 = vsyncpa [#allocation9], 1
    %1319 = vsyncpa [#allocation12], 1
    %1320 = vsyncpa [#allocation4], 1

</llo_original>
